<compile_context>
chip_gen: v7x
topology: tpu7x:2x2x1
jax: 0.10.0
libtpu: 0.0.40
codegen_flags: <defaults>
</compile_context>

<pallas_src>
import functools
import numpy as np
import jax
import jax.numpy as jnp
from jax import lax
from jax.experimental import pallas as pl
from jax.experimental.pallas import tpu as pltpu

F32 = jnp.float32
BF16 = jnp.bfloat16
LRELU_SLOPE = 0.2
LRELU_GAIN = float(np.sqrt(2.0))          # activation_funcs['lrelu']['def_gain']
_VMEM_LIMIT = 32 * 1024 * 1024

ARBITRARY_1D = pltpu.CompilerParams(dimension_semantics=("arbitrary",))
PARALLEL_2D = pltpu.CompilerParams(dimension_semantics=("parallel", "parallel"),
                                   vmem_limit_bytes=_VMEM_LIMIT)


# ----------------------------------------------------------------------------
# Pallas kernels
# ----------------------------------------------------------------------------
def _mapping_kernel(*refs, num_layers):
    """Fused MappingNetwork: normalize_2nd_moment + `num_layers` x (FC + lrelu*sqrt(2)).

    refs = (z, w0, b0, w1, b1, ..., out); all weights VMEM-resident, bf16 MXU matmuls.
    """
    x = refs[0][...]
    x = x * lax.rsqrt(jnp.mean(x * x, axis=1, keepdims=True) + 1e-8)
    for li in range(num_layers):
        w = refs[1 + 2 * li][...]
        b = refs[2 + 2 * li][...]
        y = jnp.dot(x.astype(BF16), w.astype(BF16),
                    preferred_element_type=F32) + b
        x = jnp.where(y >= 0.0, y, LRELU_SLOPE * y) * LRELU_GAIN
    refs[-1][...] = x


def _fc_kernel(x_ref, w_ref, b_ref, o_ref, *, lrelu):
    """FullyConnectedLayer (gains pre-folded into weight_t / bias at init)."""
    y = jnp.dot(x_ref[...].astype(BF16), w_ref[...].astype(BF16),
                preferred_element_type=F32) + b_ref[...]
    if lrelu:
        y = jnp.where(y >= 0.0, y, LRELU_SLOPE * y) * LRELU_GAIN
    o_ref[...] = y


def _modconv_kernel(t_ref, w_ref, *rest, demodulate, has_bias, has_noise,
                    has_residual, lrelu, act_gain, clamp):
    """StyleGAN2 modulated conv (input-scaling form) + fused epilogue for one
    (sample, hw-tile) grid step.

    t_ref: (1, K, thw)   bf16  style-scaled im2col taps (lane-dense, HW in lanes)
    w_ref: (C_out, K)    bf16  shared, sample-independent flattened conv weight
    rest : [d (1,C_out,1)], [bias (C_out,1)], [noise (1,thw)], [residual (1,C_out,thw)],
           out (1, C_out, thw)
    """
    idx = 0
    d_ref = b_ref = n_ref = r_ref = None
    if demodulate:
        d_ref = rest[idx]; idx += 1
    if has_bias:
        b_ref = rest[idx]; idx += 1
    if has_noise:
        n_ref = rest[idx]; idx += 1
    if has_residual:
        r_ref = rest[idx]; idx += 1
    o_ref = rest[idx]

    # single wide-K MXU matmul (bf16 in, f32 accumulation)
    y = jnp.dot(w_ref[...], t_ref[0], preferred_element_type=F32)   # (C_out, thw)
    if demodulate:
        y = y * d_ref[0]                       # per-sample demod, (C_out, 1) broadcast
    if has_bias:                               # fused bias/noise/act/clamp epilogue
        if has_noise:
            y = y + n_ref[...]                 # (1, thw) noise broadcast
        y = y + b_ref[...]                     # (C_out, 1) bias broadcast
        if lrelu:
            y = jnp.where(y >= 0.0, y, LRELU_SLOPE * y)
        y = jnp.clip(y * act_gain, -clamp, clamp)
    if has_residual:                           # ToRGB: img = upsample(img) + y
        y = y + r_ref[0]
    o_ref[0] = y.astype(o_ref.dtype)


def _upsample_kernel(*refs, H, W, fused, has_noise, gain, clamp):
    """SmoothUpsample (2x binomial [1,3,3,1] polyphase, separable), channel-tiled.

    refs: x (1, tc, H+2, W+2) replication-padded input,
          [bias (1,tc,1,1)], [noise phases 4x (1,1,H,W)]   (only when `fused`)
          outputs: 4 phases (1, tc, H, W); phase (a,b) = output rows 2i+a, cols 2j+b.
    When `fused`, the post-upsample bias+noise+lrelu+clamp_gain epilogue of
    SynthesisLayer2 is applied to each phase in-kernel.
    """
    x_ref = refs[0]
    idx = 1
    b_ref = None
    noise = None
    if fused:
        b_ref = refs[idx]; idx += 1
        if has_noise:
            noise = refs[idx:idx + 4]; idx += 4
    outs = refs[idx:idx + 4]

    x = x_ref[0].astype(F32)                              # (tc, H+2, W+2)
    # vertical pass, shared by both row phases: weights [1,3]/4 and [3,1]/4
    r0 = x[:, 0:H, :]
    r1 = x[:, 1:H + 1, :]
    r2 = x[:, 2:H + 2, :]
    v = (0.25 * r0 + 0.75 * r1, 0.75 * r1 + 0.25 * r2)
    for a in range(2):
        c0 = v[a][:, :, 0:W]
        c1 = v[a][:, :, 1:W + 1]
        c2 = v[a][:, :, 2:W + 2]
        for b, acc in ((0, 0.25 * c0 + 0.75 * c1), (1, 0.75 * c1 + 0.25 * c2)):
            if fused:
                acc = acc + b_ref[0]                      # (tc,1,1) bias
                if has_noise:
                    acc = acc + noise[2 * a + b][0]       # (1,H,W) noise phase
                acc = jnp.where(acc >= 0.0, acc, LRELU_SLOPE * acc)
                acc = jnp.clip(acc * gain, -clamp, clamp)
            outs[2 * a + b][0] = acc.astype(outs[2 * a + b].dtype)


# ----------------------------------------------------------------------------
# Pallas wrappers
# ----------------------------------------------------------------------------
def mapping_network(z, layers):
    n = z.shape[0]
    out_f = layers[-1]['weight_t'].shape[1]
    inputs = [z]
    in_specs = [pl.BlockSpec(z.shape, lambda i: (0, 0))]
    for lp in layers:
        inputs += [lp['weight_t'], lp['bias']]
        in_specs += [pl.BlockSpec(lp['weight_t'].shape, lambda i: (0, 0)),
                     pl.BlockSpec(lp['bias'].shape, lambda i: (0, 0))]
    return pl.pallas_call(
        functools.partial(_mapping_kernel, num_layers=len(layers)),
        grid=(1,),
        in_specs=in_specs,
        out_specs=pl.BlockSpec((n, out_f), lambda i: (0, 0)),
        out_shape=jax.ShapeDtypeStruct((n, out_f), F32),
        compiler_params=ARBITRARY_1D,
    )(*inputs)


def fully_connected(x, p, *, lrelu):
    n, in_f = x.shape
    out_f = p['weight_t'].shape[1]
    return pl.pallas_call(
        functools.partial(_fc_kernel, lrelu=lrelu),
        grid=(1,),
        in_specs=[pl.BlockSpec((n, in_f), lambda i: (0, 0)),
                  pl.BlockSpec((in_f, out_f), lambda i: (0, 0)),
                  pl.BlockSpec((1, out_f), lambda i: (0, 0))],
        out_specs=pl.BlockSpec((n, out_f), lambda i: (0, 0)),
        out_shape=jax.ShapeDtypeStruct((n, out_f), F32),
        compiler_params=ARBITRARY_1D,
    )(x, p['weight_t'], p['bias'])


def _pick_hw_tile(hw, k_dim):
    """Largest power-of-two hw tile keeping the bf16 taps block around <= 4 MiB."""
    if hw <= 512:
        return hw
    budget_elems = (4 << 20) // 2
    t = 128
    while (t * 2) <= min(hw, max(128, budget_elems // max(k_dim, 1))):
        t *= 2
    while hw % t:
        t //= 2
    return max(t, 1)


def modulated_conv2d(x, w_flat, styles, *, kernel_size, demodulate, wsq_sum=None,
                     bias=None, noise=None, residual=None, lrelu=False,
                     act_gain=1.0, clamp=256.0, out_dtype=F32):
    """Fused modulated_conv2d (+ optional bias/noise/lrelu/clamp/residual epilogue).

    Input-scaling form: x is scaled by the per-sample style (equivalent to scaling the
    weight over input channels), the shared bf16 weight does one wide-K MXU matmul per
    (sample, hw-tile) grid step, and demod scales the output rows.
    """
    n, c_in, h, w_sp = x.shape
    c_out, k_flat = w_flat.shape
    taps = kernel_size * kernel_size
    assert k_flat == taps * c_in
    pad = kernel_size // 2
    hw = h * w_sp

    # --- XLA glue: style-scale + pad + im2col (bf16), tiny demod matvec -------------
    x_mod = (x.astype(F32) * styles[:, :, None, None]).astype(BF16)
    xp = jnp.pad(x_mod, ((0, 0), (0, 0), (pad, pad), (pad, pad))) if pad else x_mod
    if taps > 1:
        t = jnp.stack([xp[:, :, kh:kh + h, kw:kw + w_sp]
                       for kh in range(kernel_size) for kw in range(kernel_size)],
                      axis=1).reshape(n, k_flat, hw)
    else:
        t = xp.reshape(n, k_flat, hw)

    thw = _pick_hw_tile(hw, k_flat)
    n_hw = hw // thw

    inputs = [t, w_flat]
    in_specs = [pl.BlockSpec((1, k_flat, thw), lambda i, j: (i, 0, j)),
                pl.BlockSpec((c_out, k_flat), lambda i, j: (0, 0))]
    if demodulate:
        # d[n, co] = rsqrt(sum_ci styles^2 * sum_k w^2 + eps): tiny matvec, left to XLA.
        d = lax.rsqrt(jnp.dot(styles * styles, wsq_sum) + 1e-8).reshape(n, c_out, 1)
        inputs.append(d)
        in_specs.append(pl.BlockSpec((1, c_out, 1), lambda i, j: (i, 0, 0)))
    has_bias = bias is not None
    has_noise = noise is not None
    has_res = residual is not None
    if has_bias:
        inputs.append(bias.reshape(c_out, 1))
        in_specs.append(pl.BlockSpec((c_out, 1), lambda i, j: (0, 0)))
    if has_noise:
        inputs.append(noise.reshape(1, hw).astype(F32))
        in_specs.append(pl.BlockSpec((1, thw), lambda i, j: (0, j)))
    if has_res:
        inputs.append(residual.reshape(n, c_out, hw).astype(F32))
        in_specs.append(pl.BlockSpec((1, c_out, thw), lambda i, j: (i, 0, j)))

    kern = functools.partial(
        _modconv_kernel, demodulate=demodulate, has_bias=has_bias,
        has_noise=has_noise, has_residual=has_res, lrelu=lrelu,
        act_gain=float(act_gain), clamp=float(clamp))
    y = pl.pallas_call(
        kern,
        grid=(n, n_hw),
        in_specs=in_specs,
        out_specs=pl.BlockSpec((1, c_out, thw), lambda i, j: (i, 0, j)),
        out_shape=jax.ShapeDtypeStruct((n, c_out, hw), out_dtype),
        compiler_params=PARALLEL_2D,
    )(*inputs)
    return y.reshape(n, c_out, h, w_sp)


def smooth_upsample(x, *, bias=None, noise=None, act_gain=1.0, clamp=256.0,
                    out_dtype=F32):
    # TODO(synk): exact SmoothUpsample source was not provided; this is the standard
    # StyleGAN2 2x binomial ([1,3,3,1]) upsample with unit DC gain and replication
    # padding at the borders.
    n, c, h, w = x.shape
    xp = jnp.pad(x, ((0, 0), (0, 0), (1, 1), (1, 1)), mode='edge')
    tc = c if c <= 64 else 64
    assert c % tc == 0
    nct = c // tc
    fused = bias is not None
    has_noise = noise is not None

    inputs = [xp]
    in_specs = [pl.BlockSpec((1, tc, h + 2, w + 2), lambda i, j: (i, j, 0, 0))]
    if fused:
        inputs.append(bias.reshape(1, c, 1, 1))
        in_specs.append(pl.BlockSpec((1, tc, 1, 1), lambda i, j: (0, j, 0, 0)))
        if has_noise:   # noise is at the (2h, 2w) output resolution; split per phase
            for a in range(2):
                for b in range(2):
                    inputs.append(noise[a::2, b::2].reshape(1, 1, h, w).astype(F32))
                    in_specs.append(pl.BlockSpec((1, 1, h, w),
                                                 lambda i, j: (0, 0, 0, 0)))
    kern = functools.partial(_upsample_kernel, H=h, W=w, fused=fused,
                             has_noise=has_noise, gain=float(act_gain),
                             clamp=float(clamp))
    phase = jax.ShapeDtypeStruct((n, c, h, w), out_dtype)
    y00, y01, y10, y11 = pl.pallas_call(
        kern,
        grid=(n, nct),
        in_specs=in_specs,
        out_specs=[pl.BlockSpec((1, tc, h, w), lambda i, j: (i, j, 0, 0))] * 4,
        out_shape=[phase] * 4,
        compiler_params=PARALLEL_2D,
    )(*inputs)
    # TODO(synk): phase interleave left to XLA (lane-interleaved in-kernel stores would
    # need strided lane stores / shuffles that do not lower reliably at these shapes).
    top = jnp.stack([y00, y01], axis=-1).reshape(n, c, h, 2 * w)
    bot = jnp.stack([y10, y11], axis=-1).reshape(n, c, h, 2 * w)
    return jnp.stack([top, bot], axis=-2).reshape(n, c, 2 * h, 2 * w)


# ----------------------------------------------------------------------------
# Layers (StyleGAN2 path: SynthesisLayer2 / ToRGBLayer2)
# ----------------------------------------------------------------------------
def synthesis_layer2(x, w, p, *, noise_mode, upsample, gain=1.0):
    styles = fully_connected(w, p['affine'], lrelu=False)
    noise = None
    if noise_mode == 'const':
        noise = p['noise_const'] * p['noise_strength'][0]
    # TODO(synk): noise_mode='random' torch RNG semantics not reproduced (treated as
    # zero noise; exact for the reference init where noise_strength == 0).
    act_gain = LRELU_GAIN * gain
    clamp = 256.0 * gain
    if upsample:
        y = modulated_conv2d(x, p['weight_flat'], styles, kernel_size=3,
                             demodulate=True, wsq_sum=p['wsq_sum'],
                             out_dtype=BF16)                          # raw conv (bf16)
        return smooth_upsample(y, bias=p['bias'], noise=noise,
                               act_gain=act_gain, clamp=clamp,
                               out_dtype=BF16)                        # fused epilogue
    return modulated_conv2d(x, p['weight_flat'], styles, kernel_size=3,
                            demodulate=True, wsq_sum=p['wsq_sum'],
                            bias=p['bias'], noise=noise, lrelu=True,
                            act_gain=act_gain, clamp=clamp, out_dtype=BF16)


def torgb_layer2(x, w, p, residual=None):
    # ToRGB weight_gain is folded into the affine params at init (styles pre-scaled).
    styles = fully_connected(w, p['affine'], lrelu=False)
    return modulated_conv2d(x, p['weight_flat'], styles, kernel_size=1,
                            demodulate=False, bias=p['bias'], noise=None,
                            residual=residual, lrelu=False,
                            act_gain=1.0, clamp=256.0, out_dtype=F32)


# ----------------------------------------------------------------------------
# Parameter initialization (deterministic, synthetic; weights pre-laid-out)
# ----------------------------------------------------------------------------
def init_fc(key, in_f, out_f, lr_multiplier=1.0, bias_init=0.0, extra_scale=1.0):
    w = jax.random.normal(key, (out_f, in_f), F32) / lr_multiplier
    weight_gain = lr_multiplier / np.sqrt(in_f)
    return dict(                       # gains folded into the stored params
        weight_t=jnp.transpose(w) * (weight_gain * extra_scale),      # (in_f, out_f)
        bias=jnp.full((1, out_f), bias_init * lr_multiplier * extra_scale, F32))


def init_syn_layer(key, in_c, out_c, w_dim, resolution):
    k1, k2, k3 = jax.random.split(key, 3)
    w = jax.random.normal(k2, (out_c, in_c, 3, 3), F32)
    return dict(
        affine=init_fc(k1, w_dim, in_c, bias_init=1.0),
        # shared, pre-flattened (C_out, taps*C_in) bf16 weight, tap-major K
        weight_flat=jnp.transpose(w, (0, 2, 3, 1)).reshape(out_c, 9 * in_c).astype(BF16),
        # sum over taps of w^2, (C_in, C_out) f32 (for the demod matvec)
        wsq_sum=jnp.transpose(jnp.sum(w * w, axis=(2, 3))),
        noise_const=jax.random.normal(k3, (resolution, resolution), F32),
        noise_strength=jnp.zeros((1,), F32),
        bias=jnp.zeros((out_c,), F32))


def init_torgb(key, in_c, img_c, w_dim):
    k1, k2 = jax.random.split(key)
    w = jax.random.normal(k2, (img_c, in_c, 1, 1), F32)
    return dict(
        affine=init_fc(k1, w_dim, in_c, bias_init=1.0,
                       extra_scale=1.0 / np.sqrt(in_c)),   # fold ToRGB weight_gain
        weight_flat=w.reshape(img_c, in_c).astype(BF16),   # taps = 1
        bias=jnp.zeros((img_c,), F32))


def init_generator(key, z_dim, w_dim, w_num_layers, img_resolution, img_channels,
                   channel_base=16384, channel_max=512):
    log2 = int(np.log2(img_resolution))
    block_res = [2 ** i for i in range(2, log2 + 1)]
    num_ws = 2 * (len(block_res) + 1)
    channels = {r: min(channel_base // r, channel_max) for r in block_res}

    keys = jax.random.split(key, 2 + len(block_res))
    feats = [z_dim] + [w_dim] * w_num_layers
    mkeys = jax.random.split(keys[0], w_num_layers)
    mapping = [init_fc(mkeys[i], feats[i], feats[i + 1],
                       lr_multiplier=0.01, bias_init=0.0)
               for i in range(w_num_layers)]

    pk = jax.random.split(keys[1], 3)
    prologue = dict(
        const=jax.random.normal(pk[0], (channels[block_res[0]],
                                        block_res[0], block_res[0]), F32),
        conv1=init_syn_layer(pk[1], channels[block_res[0]],
                             channels[block_res[0]], w_dim, block_res[0]),
        torgb=init_torgb(pk[2], channels[block_res[0]], img_channels, w_dim))

    blocks = []
    for i, res in enumerate(block_res[1:]):
        bk = jax.random.split(keys[2 + i], 3)
        blocks.append(dict(
            conv0=init_syn_layer(bk[0], channels[res // 2], channels[res], w_dim, res),
            conv1=init_syn_layer(bk[1], channels[res], channels[res], w_dim, res),
            torgb=init_torgb(bk[2], channels[res], img_channels, w_dim)))

    params = dict(mapping=mapping, prologue=prologue, blocks=blocks,
                  w_avg=jnp.zeros((w_dim,), F32))
    meta = dict(block_res=block_res, num_ws=num_ws)
    return params, meta


# ----------------------------------------------------------------------------
# Generator forward  (c=None -> c_dim==0 path, seperate_mapping_networks=False)
# ----------------------------------------------------------------------------
def generator_forward(params, meta, z, *, truncation_psi=1.0, noise_mode='const'):
    # MappingNetwork (fused): normalize_2nd_moment + lrelu FC stack, broadcast to num_ws
    x = mapping_network(z, params['mapping'])
    ws = jnp.repeat(x[:, None, :], meta['num_ws'], axis=1)
    if truncation_psi != 1.0:
        wa = params['w_avg'][None, None, :]
        ws = wa + truncation_psi * (ws - wa)

    block_res = meta['block_res']
    split_ws = [ws[:, 0:2]] + [ws[:, 2 * i + 1:2 * i + 4]
                               for i in range(len(block_res))]

    # SynthesisPrologue (res = 4)
    p = params['prologue']
    n = z.shape[0]
    xx = jnp.broadcast_to(p['const'][None], (n,) + p['const'].shape)
    xx = synthesis_layer2(xx, split_ws[0][:, 0], p['conv1'],
                          noise_mode=noise_mode, upsample=False)
    img = torgb_layer2(xx, split_ws[0][:, 1], p['torgb'])

    # SynthesisBlocks
    for bi in range(len(block_res) - 1):
        bp = params['blocks'][bi]
        wsb = split_ws[bi + 1]
        xx = synthesis_layer2(xx, wsb[:, 0], bp['conv0'],
                              noise_mode=noise_mode, upsample=True)
        xx = synthesis_layer2(xx, wsb[:, 1], bp['conv1'],
                              noise_mode=noise_mode, upsample=False)
        img_up = smooth_upsample(img, out_dtype=F32)       # image-path upsample
        img = torgb_layer2(xx, wsb[:, 2], bp['torgb'],
                           residual=img_up)                # residual add fused in-kernel
    return img


# ----------------------------------------------------------------------------
if __name__ == "__main__":
    key = jax.random.PRNGKey(0)
    pkey, zkey = jax.random.split(key)

    # Small config consistent with Generator(z_dim, c_dim=0, w_dim, ...,
    # w_num_layers, img_resolution, img_channels, synthesis_layer='stylegan2')
    Z_DIM, W_DIM, W_LAYERS = 32, 32, 2
    IMG_RES, IMG_CH, BATCH = 16, 3, 2

    params, meta = init_generator(pkey, Z_DIM, W_DIM, W_LAYERS, IMG_RES, IMG_CH,
                                  channel_base=256, channel_max=64)

    z = jax.random.normal(zkey, (BATCH, Z_DIM), F32)
    img = generator_forward(params, meta, z, truncation_psi=1.0, noise_mode='const')
    img = jax.block_until_ready(img)

    assert img.shape == (BATCH, IMG_CH, IMG_RES, IMG_RES), img.shape
    assert img.dtype == F32
    assert bool(jnp.all(jnp.isfinite(img)))
    print("KERNEL_OK")
</pallas_src>

<mosaic_0001>
module attributes {stable_mosaic.version = 11 : i64} {
  func.func @_mapping_kernel(%arg0: i32, %arg1: memref<2x32xf32, #tpu.memory_space<vmem>>, %arg2: memref<32x32xf32, #tpu.memory_space<vmem>>, %arg3: memref<1x32xf32, #tpu.memory_space<vmem>>, %arg4: memref<32x32xf32, #tpu.memory_space<vmem>>, %arg5: memref<1x32xf32, #tpu.memory_space<vmem>>, %arg6: memref<2x32xf32, #tpu.memory_space<vmem>>) attributes {dimension_semantics = [#tpu.dimension_semantics<arbitrary>], iteration_bounds = array<i64: 1>, scalar_prefetch = 0 : i64, scratch_operands = 0 : i64, tpu.core_type = #tpu.core_type<tc>, window_params = [{pipeline_mode = #tpu.pipeline_mode<synchronous>, transform_indices = @transform_0, window_bounds = array<i64: 2, 32>}, {pipeline_mode = #tpu.pipeline_mode<synchronous>, transform_indices = @transform_1, window_bounds = array<i64: 32, 32>}, {pipeline_mode = #tpu.pipeline_mode<synchronous>, transform_indices = @transform_2, window_bounds = array<i64: 1, 32>}, {pipeline_mode = #tpu.pipeline_mode<synchronous>, transform_indices = @transform_3, window_bounds = array<i64: 32, 32>}, {pipeline_mode = #tpu.pipeline_mode<synchronous>, transform_indices = @transform_4, window_bounds = array<i64: 1, 32>}, {pipeline_mode = #tpu.pipeline_mode<synchronous>, transform_indices = @transform_5, window_bounds = array<i64: 2, 32>}]} {
    %c0 = arith.constant 0 : index
    %c0_0 = arith.constant 0 : index
    %0 = vector.load %arg1[%c0, %c0_0] : memref<2x32xf32, #tpu.memory_space<vmem>>, vector<2x32xf32>
    %1 = arith.mulf %0, %0 : vector<2x32xf32>
    %cst = arith.constant dense<0.000000e+00> : vector<2xf32>
    %2 = vector.multi_reduction <add>, %1, %cst [1] : vector<2x32xf32> to vector<2xf32>
    %3 = vector.shape_cast %2 : vector<2xf32> to vector<2x1xf32>
    %cst_1 = arith.constant 3.200000e+01 : f32
    %4 = vector.broadcast %cst_1 : f32 to vector<2x1xf32>
    %5 = arith.divf %3, %4 : vector<2x1xf32>
    %cst_2 = arith.constant 9.99999993E-9 : f32
    %6 = vector.broadcast %cst_2 : f32 to vector<2x1xf32>
    %7 = arith.addf %5, %6 : vector<2x1xf32>
    %8 = math.rsqrt %7 : vector<2x1xf32>
    %9 = vector.broadcast %8 : vector<2x1xf32> to vector<2x32xf32>
    %10 = arith.mulf %0, %9 : vector<2x32xf32>
    %c0_3 = arith.constant 0 : index
    %c0_4 = arith.constant 0 : index
    %11 = vector.load %arg2[%c0_3, %c0_4] : memref<32x32xf32, #tpu.memory_space<vmem>>, vector<32x32xf32>
    %c0_5 = arith.constant 0 : index
    %c0_6 = arith.constant 0 : index
    %12 = vector.load %arg3[%c0_5, %c0_6] : memref<1x32xf32, #tpu.memory_space<vmem>>, vector<1x32xf32>
    %13 = arith.truncf %10 : vector<2x32xf32> to vector<2x32xbf16>
    %14 = arith.truncf %11 : vector<32x32xf32> to vector<32x32xbf16>
    %cst_7 = arith.constant dense<0.000000e+00> : vector<2x32xf32>
    %15 = tpu.matmul %13, %14, %cst_7 {dimension_numbers = #tpu.dot_dimension_numbers<[1], [0], [0], [1], [0, 0, 1, 1], [], []>} : vector<2x32xbf16>, vector<32x32xbf16>, vector<2x32xf32> -> vector<2x32xf32>
    %16 = vector.broadcast %12 : vector<1x32xf32> to vector<2x32xf32>
    %17 = arith.addf %15, %16 : vector<2x32xf32>
    %cst_8 = arith.constant 0.000000e+00 : f32
    %18 = vector.broadcast %cst_8 : f32 to vector<2x32xf32>
    %19 = arith.cmpf oge, %17, %18 : vector<2x32xf32>
    %cst_9 = arith.constant 2.000000e-01 : f32
    %20 = vector.broadcast %cst_9 : f32 to vector<2x32xf32>
    %21 = arith.mulf %20, %17 : vector<2x32xf32>
    %22 = arith.select %19, %17, %21 : vector<2x32xi1>, vector<2x32xf32>
    %cst_10 = arith.constant 1.41421354 : f32
    %23 = vector.broadcast %cst_10 : f32 to vector<2x32xf32>
    %24 = arith.mulf %22, %23 : vector<2x32xf32>
    %c0_11 = arith.constant 0 : index
    %c0_12 = arith.constant 0 : index
    %25 = vector.load %arg4[%c0_11, %c0_12] : memref<32x32xf32, #tpu.memory_space<vmem>>, vector<32x32xf32>
    %c0_13 = arith.constant 0 : index
    %c0_14 = arith.constant 0 : index
    %26 = vector.load %arg5[%c0_13, %c0_14] : memref<1x32xf32, #tpu.memory_space<vmem>>, vector<1x32xf32>
    %27 = arith.truncf %24 : vector<2x32xf32> to vector<2x32xbf16>
    %28 = arith.truncf %25 : vector<32x32xf32> to vector<32x32xbf16>
    %cst_15 = arith.constant dense<0.000000e+00> : vector<2x32xf32>
    %29 = tpu.matmul %27, %28, %cst_15 {dimension_numbers = #tpu.dot_dimension_numbers<[1], [0], [0], [1], [0, 0, 1, 1], [], []>} : vector<2x32xbf16>, vector<32x32xbf16>, vector<2x32xf32> -> vector<2x32xf32>
    %30 = vector.broadcast %26 : vector<1x32xf32> to vector<2x32xf32>
    %31 = arith.addf %29, %30 : vector<2x32xf32>
    %cst_16 = arith.constant 0.000000e+00 : f32
    %32 = vector.broadcast %cst_16 : f32 to vector<2x32xf32>
    %33 = arith.cmpf oge, %31, %32 : vector<2x32xf32>
    %cst_17 = arith.constant 2.000000e-01 : f32
    %34 = vector.broadcast %cst_17 : f32 to vector<2x32xf32>
    %35 = arith.mulf %34, %31 : vector<2x32xf32>
    %36 = arith.select %33, %31, %35 : vector<2x32xi1>, vector<2x32xf32>
    %cst_18 = arith.constant 1.41421354 : f32
    %37 = vector.broadcast %cst_18 : f32 to vector<2x32xf32>
    %38 = arith.mulf %36, %37 : vector<2x32xf32>
    %c0_19 = arith.constant 0 : index
    %c0_20 = arith.constant 0 : index
    %39 = vector.load %arg6[%c0_19, %c0_20] : memref<2x32xf32, #tpu.memory_space<vmem>>, vector<2x32xf32>
    tpu.vector_store %arg6[%c0_19, %c0_20], %38 {strides = array<i32>} : memref<2x32xf32, #tpu.memory_space<vmem>>, vector<2x32xf32>,
    return
  }
  func.func @transform_0(%arg0: i32) -> (i32, i32) {
    %c0_i32 = arith.constant 0 : i32
    %c0_i32_0 = arith.constant 0 : i32
    %c0_i32_1 = arith.constant 0 : i32
    return %c0_i32, %c0_i32_0 : i32, i32
  }
  func.func @transform_1(%arg0: i32) -> (i32, i32) {
    %c0_i32 = arith.constant 0 : i32
    %c0_i32_0 = arith.constant 0 : i32
    %c0_i32_1 = arith.constant 0 : i32
    return %c0_i32, %c0_i32_0 : i32, i32
  }
  func.func @transform_2(%arg0: i32) -> (i32, i32) {
    %c0_i32 = arith.constant 0 : i32
    %c0_i32_0 = arith.constant 0 : i32
    %c0_i32_1 = arith.constant 0 : i32
    return %c0_i32, %c0_i32_0 : i32, i32
  }
  func.func @transform_3(%arg0: i32) -> (i32, i32) {
    %c0_i32 = arith.constant 0 : i32
    %c0_i32_0 = arith.constant 0 : i32
    %c0_i32_1 = arith.constant 0 : i32
    return %c0_i32, %c0_i32_0 : i32, i32
  }
  func.func @transform_4(%arg0: i32) -> (i32, i32) {
    %c0_i32 = arith.constant 0 : i32
    %c0_i32_0 = arith.constant 0 : i32
    %c0_i32_1 = arith.constant 0 : i32
    return %c0_i32, %c0_i32_0 : i32, i32
  }
  func.func @transform_5(%arg0: i32) -> (i32, i32) {
    %c0_i32 = arith.constant 0 : i32
    %c0_i32_0 = arith.constant 0 : i32
    %c0_i32_1 = arith.constant 0 : i32
    return %c0_i32, %c0_i32_0 : i32, i32
  }
}

</mosaic_0001>

<llo_original>
// kernel: tpu_custom_call.1
$region0: #{tpu_custom_call.1}
  #allocation0 [shape = 'u32[]', space=smem, size = 0x4, offset = 0x4, fixed_abs, tag = 'smem constant byte address 0x4 - core index']
  #allocation1 [shape = 'u32[144,128]{1,0:T(1,128)}', space=vmem, size = 0x12000, scoped, tag = 'internal scratch']
  %s0 = inlined_call_operand.hbm [shape: f32[2,32], index: 0, kind: input, shape index: {}]
  %s1 = inlined_call_operand.hbm [shape: f32[32,32], index: 1, kind: input, shape index: {}]
  %s2 = inlined_call_operand.vmem [shape: f32[1,32], index: 2, kind: input, shape index: {}]
  %s3 = inlined_call_operand.hbm [shape: f32[32,32], index: 3, kind: input, shape index: {}]
  %s4 = inlined_call_operand.vmem [shape: f32[1,32], index: 4, kind: input, shape index: {}]
  %s5 = inlined_call_operand.hbm [shape: f32[2,32], index: 5, kind: output, shape index: {}]
  %s6 = sld [smem:[#allocation0]]
  $region42: #{tpu_custom_call.1} parent=0
    _
  %s8 = ssub.s32 1, %s6
  %s9 = scalar_select 0, %s8, %s6
  $region1: #{tpu_custom_call.1} parent=0
    #allocation2 [shape = 'u8[1024]{0}', space=vmem, size = 0x400, scoped, tag = 'input window, operand 0, single buffered']
    #allocation3 [shape = 's32[1]{0}', space=sflag, size = 0x4, scoped, tag = 'scoped memory for tpu_custom_call.1']
    #allocation4 [shape = 's32[1]{0}', space=sflag, size = 0x4, scoped, tag = 'scoped memory for tpu_custom_call.1']
    #allocation5 [shape = 'u8[16384]{0}', space=vmem, size = 0x4000, scoped, tag = 'input window, operand 1, single buffered']
    #allocation6 [shape = 's32[1]{0}', space=sflag, size = 0x4, scoped, tag = 'scoped memory for tpu_custom_call.1']
    #allocation7 [shape = 'u8[16384]{0}', space=vmem, size = 0x4000, scoped, tag = 'input window, operand 3, single buffered']
    #allocation8 [shape = 'u8[1024]{0}', space=vmem, size = 0x400, scoped, tag = 'output window, operand 0, single buffered']
    %10 = vsyncpa [#allocation3], 0
    %11 = vsyncpa [#allocation6], 0
    %12 = vsyncpa [#allocation4], 0
    // Predicated region
    $region2: #{tpu_custom_call.1} parent=1 // pred_check
      _
    $region3: #{tpu_custom_call.1} parent=1 // pred_check_branch
      %14 = sbr.rel (0) target = $region5
    $region4: #{tpu_custom_call.1} parent=1 // pred_region
      %s16 = ssub.s32 32, 32
      %17 = vsyncadd [#allocation3], %s16
      %s19 = sshll.u32 [#allocation2], 4
      %s20 = int_to_ptr.vmem [resolvable:$true] %s19
      %22 = dma.hbm_to_vmem [thread:$0]  %s0, 32, %s20, [#allocation3]
    $region5: #{tpu_custom_call.1} parent=1 // pred_fallthru
      _
    // Predicated region
    $region6: #{tpu_custom_call.1} parent=1 // pred_check
      _
    $region7: #{tpu_custom_call.1} parent=1 // pred_check_branch
      %24 = sbr.rel (0) target = $region9
    $region8: #{tpu_custom_call.1} parent=1 // pred_region
      %s26 = ssub.s32 512, 512
      %27 = vsyncadd [#allocation6], %s26
      %s28 = sshll.u32 [#allocation5], 4
      %s29 = int_to_ptr.vmem [resolvable:$true] %s28
      %34 = dma.hbm_to_vmem [thread:$0]  %s1, 512, %s29, [#allocation6], 128, 128, 8
    $region9: #{tpu_custom_call.1} parent=1 // pred_fallthru
      _
    // Predicated region
    $region10: #{tpu_custom_call.1} parent=1 // pred_check
      _
    $region11: #{tpu_custom_call.1} parent=1 // pred_check_branch
      %36 = sbr.rel (0) target = $region13
    $region12: #{tpu_custom_call.1} parent=1 // pred_region
      _
    $region13: #{tpu_custom_call.1} parent=1 // pred_fallthru
      _
    // Predicated region
    $region14: #{tpu_custom_call.1} parent=1 // pred_check
      _
    $region15: #{tpu_custom_call.1} parent=1 // pred_check_branch
      %38 = sbr.rel (0) target = $region17
    $region16: #{tpu_custom_call.1} parent=1 // pred_region
      %s40 = ssub.s32 512, 512
      %41 = vsyncadd [#allocation6], %s40
      %s42 = sshll.u32 [#allocation7], 4
      %s43 = int_to_ptr.vmem [resolvable:$true] %s42
      %48 = dma.hbm_to_vmem [thread:$0]  %s3, 512, %s43, [#allocation6], 128, 128, 8
    $region17: #{tpu_custom_call.1} parent=1 // pred_fallthru
      _
    // Predicated region
    $region18: #{tpu_custom_call.1} parent=1 // pred_check
      _
    $region19: #{tpu_custom_call.1} parent=1 // pred_check_branch
      %50 = sbr.rel (0) target = $region21
    $region20: #{tpu_custom_call.1} parent=1 // pred_region
      _
    $region21: #{tpu_custom_call.1} parent=1 // pred_fallthru
      _
    // Predicated region
    $region22: #{tpu_custom_call.1} parent=1 // pred_check
      _
    $region23: #{tpu_custom_call.1} parent=1 // pred_check_branch
      %52 = sbr.rel (0) target = $region25
    $region24: #{tpu_custom_call.1} parent=1 // pred_region
      %53 = dma.done [#allocation3], 32
    $region25: #{tpu_custom_call.1} parent=1 // pred_fallthru
      _
    // Predicated region
    $region26: #{tpu_custom_call.1} parent=1 // pred_check
      _
    $region27: #{tpu_custom_call.1} parent=1 // pred_check_branch
      %55 = sbr.rel (0) target = $region29
    $region28: #{tpu_custom_call.1} parent=1 // pred_region
      %56 = dma.done [#allocation6], 512
    $region29: #{tpu_custom_call.1} parent=1 // pred_fallthru
      _
    // Predicated region
    $region30: #{tpu_custom_call.1} parent=1 // pred_check
      _
    $region31: #{tpu_custom_call.1} parent=1 // pred_check_branch
      %58 = sbr.rel (0) target = $region33
    $region32: #{tpu_custom_call.1} parent=1 // pred_region
      %59 = dma.done [#allocation6], 512
    $region33: #{tpu_custom_call.1} parent=1 // pred_fallthru
      _
    %v61 = vld [vmem:[#allocation2] sm:$0x3]
    %v62 = vmul.f32 %v61, %v61
    %vm63 = vcmask 254976
    %v64 = vsel %vm63, %v62, 0.0
    %65 = vadd.xlane.f32.xlu0 %v64
    %v66 = vpop.xlane.xlu0 %65
    %v67 = vrcp.pop 32.0
    %v68 = vmul.f32 %v66, %v67
    %v69 = vadd.f32 %v68, 1e-08
    %v70 = vrsqrt.pop %v69
    %v71 = vmul.f32 %v61, %v70
    %v72 = vld [vmem:[#allocation5] sm:$0xff]
    %v73 = vld [vmem:[#allocation5 + $0x8] sm:$0xff]
    %v74 = vld [vmem:[#allocation5 + $0x10] sm:$0xff]
    %v75 = vld [vmem:[#allocation5 + $0x18] sm:$0xff]
    %v76 = vld [vmem:[%s2] sm:$0x1]
    %v77 = vpack.c.bf16 %v71, %v71
    %v78 = vpack.c.bf16 %v73, %v72
    %v79 = vpack.c.bf16 %v75, %v74
    %v81 = vlaneseq
    %v82 = vshrl.u32 %v81, 7
    %v83 = vsub.s32 0, %v82
    %v84 = vrot.slane %v76, %v83
    %vm86 = vcmask 261120
    %v88 = vsel %vm86, %v77, 0
    %90 = vmatprep.subr.bf16.mxu0 0
    %91 = vmatpush1.bf16.msra.mxu0 %v78
    %92 = vmatprep.subr.bf16.mxu0 0
    %93 = vmatpush1.bf16.msra.mxu0 %v79
    %94 = vmatprep.subr.bf16.mxu0 0
    %95 = vmatpush1.bf16.msra.mxu0 0
    %96 = vmatprep.subr.bf16.mxu0 0
    %97 = vmatpush1.bf16.msra.mxu0 0
    %98 = vmatprep.subr.bf16.mxu0 0
    %99 = vmatpush1.bf16.msra.mxu0 0
    %100 = vmatprep.subr.bf16.mxu0 0
    %101 = vmatpush1.bf16.msra.mxu0 0
    %102 = vmatprep.subr.bf16.mxu0 0
    %103 = vmatpush1.bf16.msra.mxu0 0
    %104 = vmatprep.subr.bf16.mxu0 0
    %105 = vmatpush1.bf16.msra.mxu0 0
    %106 = vmatprep.subr.bf16.mxu0 0
    %107 = vmatpush1.bf16.msra.mxu0 0
    %108 = vmatprep.subr.bf16.mxu0 0
    %109 = vmatpush1.bf16.msra.mxu0 0
    %110 = vmatprep.subr.bf16.mxu0 0
    %111 = vmatpush1.bf16.msra.mxu0 0
    %112 = vmatprep.subr.bf16.mxu0 0
    %113 = vmatpush1.bf16.msra.mxu0 0
    %114 = vmatprep.subr.bf16.mxu0 0
    %115 = vmatpush1.bf16.msra.mxu0 0
    %116 = vmatprep.subr.bf16.mxu0 0
    %117 = vmatpush1.bf16.msra.mxu0 0
    %118 = vmatprep.subr.bf16.mxu0 0
    %119 = vmatpush1.bf16.msra.mxu0 0
    %120 = vmatprep.subr.bf16.mxu0 0
    %121 = vmatpush1.bf16.msra.mxu0 0
    %122 = vmatprep.mubr.bf16.mxu0 0
    %123 = vmatmul.mubr.bf16.gmra.mrb[0].mxu0 %v88
    %v124 = vpop.f32.mrb[0].mxu0
    %v125 = vadd.f32 %v84, %v124
    %v126 = vpop.f32.mrb[0].mxu0
    %v127 = vpop.f32.mrb[0].mxu0
    %v128 = vpop.f32.mrb[0].mxu0
    %129 = vdwg.mxu0
    %vm130 = vcmp.ge.f32.partialorder %v125, 0.0
    %v131 = vmul.f32 %v125, 0.2
    %v132 = vsel %vm130, %v125, %v131
    %v133 = vmul.f32 %v132, 1.4142135
    %v134 = vld [vmem:[#allocation7] sm:$0xff]
    %v135 = vld [vmem:[#allocation7 + $0x8] sm:$0xff]
    %v136 = vld [vmem:[#allocation7 + $0x10] sm:$0xff]
    %v137 = vld [vmem:[#allocation7 + $0x18] sm:$0xff]
    %v138 = vld [vmem:[%s4] sm:$0x1]
    %v139 = vpack.c.bf16 %v133, %v133
    %v140 = vpack.c.bf16 %v135, %v134
    %v141 = vpack.c.bf16 %v137, %v136
    %v143 = vlaneseq
    %v144 = vshrl.u32 %v143, 7
    %v145 = vsub.s32 0, %v144
    %v146 = vrot.slane %v138, %v145
    %v149 = vsel %vm86, %v139, 0
    %151 = vmatprep.subr.bf16.mxu0 0
    %152 = vmatpush1.bf16.msra.mxu0 %v140
    %153 = vmatprep.subr.bf16.mxu0 0
    %154 = vmatpush1.bf16.msra.mxu0 %v141
    %155 = vmatprep.subr.bf16.mxu0 0
    %156 = vmatpush1.bf16.msra.mxu0 0
    %157 = vmatprep.subr.bf16.mxu0 0
    %158 = vmatpush1.bf16.msra.mxu0 0
    %159 = vmatprep.subr.bf16.mxu0 0
    %160 = vmatpush1.bf16.msra.mxu0 0
    %161 = vmatprep.subr.bf16.mxu0 0
    %162 = vmatpush1.bf16.msra.mxu0 0
    %163 = vmatprep.subr.bf16.mxu0 0
    %164 = vmatpush1.bf16.msra.mxu0 0
    %165 = vmatprep.subr.bf16.mxu0 0
    %166 = vmatpush1.bf16.msra.mxu0 0
    %167 = vmatprep.subr.bf16.mxu0 0
    %168 = vmatpush1.bf16.msra.mxu0 0
    %169 = vmatprep.subr.bf16.mxu0 0
    %170 = vmatpush1.bf16.msra.mxu0 0
    %171 = vmatprep.subr.bf16.mxu0 0
    %172 = vmatpush1.bf16.msra.mxu0 0
    %173 = vmatprep.subr.bf16.mxu0 0
    %174 = vmatpush1.bf16.msra.mxu0 0
    %175 = vmatprep.subr.bf16.mxu0 0
    %176 = vmatpush1.bf16.msra.mxu0 0
    %177 = vmatprep.subr.bf16.mxu0 0
    %178 = vmatpush1.bf16.msra.mxu0 0
    %179 = vmatprep.subr.bf16.mxu0 0
    %180 = vmatpush1.bf16.msra.mxu0 0
    %181 = vmatprep.subr.bf16.mxu0 0
    %182 = vmatpush1.bf16.msra.mxu0 0
    %183 = vmatprep.mubr.bf16.mxu0 0
    %184 = vmatmul.mubr.bf16.gmra.mrb[0].mxu0 %v149
    %v185 = vpop.f32.mrb[0].mxu0
    %v186 = vadd.f32 %v146, %v185
    %v187 = vpop.f32.mrb[0].mxu0
    %v188 = vpop.f32.mrb[0].mxu0
    %v189 = vpop.f32.mrb[0].mxu0
    %190 = vdwg.mxu0
    %vm191 = vcmp.ge.f32.partialorder %v186, 0.0
    %v192 = vmul.f32 %v186, 0.2
    %v193 = vsel %vm191, %v186, %v192
    %v194 = vmul.f32 %v193, 1.4142135
    %195 = vst.msk [vmem:[#allocation8] sm:$0x3] %vm63, %v194
    // Predicated region
    $region34: #{tpu_custom_call.1} parent=1 // pred_check
      _
    $region35: #{tpu_custom_call.1} parent=1 // pred_check_branch
      %197 = sbr.rel (0) target = $region37
    $region36: #{tpu_custom_call.1} parent=1 // pred_region
      %s199 = ssub.s32 32, 32
      %200 = vsyncadd [#allocation4], %s199
      %s202 = sshll.u32 [#allocation8], 4
      %s203 = int_to_ptr.vmem [resolvable:$true] %s202
      %205 = dma.vmem_to_hbm [thread:$0]  %s203, 32, %s5, [#allocation4]
    $region37: #{tpu_custom_call.1} parent=1 // pred_fallthru
      _
    // Predicated region
    $region38: #{tpu_custom_call.1} parent=1 // pred_check
      _
    $region39: #{tpu_custom_call.1} parent=1 // pred_check_branch
      %207 = sbr.rel (0) target = $region41
    $region40: #{tpu_custom_call.1} parent=1 // pred_region
      %208 = dma.done [#allocation4], 32
    $region41: #{tpu_custom_call.1} parent=1 // pred_fallthru
      _
    %209 = vsyncpa [#allocation3], 1
    %210 = vsyncpa [#allocation6], 1
    %211 = vsyncpa [#allocation4], 1

</llo_original>
